<compile_context>
chip_gen: v5e
topology: v5e:2x2
jax: 0.10.0
libtpu: 0.0.40
codegen_flags: <defaults>
</compile_context>

<pallas_src>
import jax
import jax.numpy as jnp
from jax import lax
from jax.experimental import pallas as pl
from jax.experimental.pallas import tpu as pltpu

T_STEPS = 22
IN_DIM = 400
HIDDEN = 64


# ------------------------------ Pallas kernel ------------------------------ #
def _widar_rnn_kernel(x_ref, wih_ref, whh_ref, brnn_ref, wfc_ref, bfc_ref, out_ref):
    """Fused tanh-RNN(400->64) over T steps + final Linear(64->C).

    x_ref:    (T, B, D)  time-major input sequence
    wih_ref:  (D, H)     W_ih^T
    whh_ref:  (H, H)     W_hh^T
    brnn_ref: (1, H)     b_ih + b_hh (folded)
    wfc_ref:  (H, C)     W_fc^T
    bfc_ref:  (1, C)     b_fc
    out_ref:  (B, C)
    """
    T, B, _ = x_ref.shape
    H = whh_ref.shape[0]
    brnn = brnn_ref[...]                                    # (1, H), hoisted

    def step(t, h):
        xt = x_ref[t]                                       # (B, D) leading-dim load
        pre = jnp.dot(xt, wih_ref[...], preferred_element_type=jnp.float32)
        pre = pre + jnp.dot(h, whh_ref[...], preferred_element_type=jnp.float32)
        return jnp.tanh(pre + brnn)                         # (B, H), tanh -> EUP

    h_final = lax.fori_loop(0, T, step, jnp.zeros((B, H), jnp.float32))

    logits = jnp.dot(h_final, wfc_ref[...], preferred_element_type=jnp.float32)
    out_ref[...] = (logits + bfc_ref[...]).astype(out_ref.dtype)


# ------------------------------ wrapper ------------------------------------ #
def widar_rnn_forward(x, params):
    """x: any shape reshapable to (B, 22, 400), e.g. (B, 22, 20, 20)."""
    x_seq = x.reshape(-1, T_STEPS, IN_DIM)                  # == x.view(-1, 22, 400)
    x_tbd = jnp.transpose(x_seq, (1, 0, 2))                 # == permute(1, 0, 2) -> (T, B, D)
    B = x_tbd.shape[1]
    C = params["fc_w"].shape[0]

    wih = params["w_ih"].T                                  # (D, H)
    whh = params["w_hh"].T                                  # (H, H)
    brnn = (params["b_ih"] + params["b_hh"]).reshape(1, HIDDEN)
    wfc = params["fc_w"].T                                  # (H, C)
    bfc = params["fc_b"].reshape(1, C)

    def full(shape):
        return pl.BlockSpec(shape, lambda i, _n=len(shape): (0,) * _n)

    return pl.pallas_call(
        _widar_rnn_kernel,
        out_shape=jax.ShapeDtypeStruct((B, C), jnp.float32),
        grid=(1,),
        in_specs=[
            full((T_STEPS, B, IN_DIM)),
            full((IN_DIM, HIDDEN)),
            full((HIDDEN, HIDDEN)),
            full((1, HIDDEN)),
            full((HIDDEN, C)),
            full((1, C)),
        ],
        out_specs=full((B, C)),
        compiler_params=pltpu.CompilerParams(
            dimension_semantics=("arbitrary",)),
    )(x_tbd, wih, whh, brnn, wfc, bfc)


# --------------------------- pure-JAX reference ----------------------------- #
def ref_forward(x, params):
    mm = lambda a, b: jnp.dot(a, b, precision=lax.Precision.HIGHEST)
    x_seq = x.reshape(-1, T_STEPS, IN_DIM)
    x_tbd = jnp.transpose(x_seq, (1, 0, 2))                 # (T, B, D)
    B = x_tbd.shape[1]

    def step(h, xt):
        pre = (mm(xt, params["w_ih"].T) + params["b_ih"]
               + mm(h, params["w_hh"].T) + params["b_hh"])
        h = jnp.tanh(pre)
        return h, None

    h0 = jnp.zeros((B, HIDDEN), jnp.float32)
    hT, _ = lax.scan(step, h0, x_tbd)
    return mm(hT, params["fc_w"].T) + params["fc_b"]


# ----------------------------------- main ----------------------------------- #
if __name__ == "__main__":
    B, num_classes = 2, 6
    key = jax.random.PRNGKey(0)
    ks = jax.random.split(key, 7)

    bound = 1.0 / (HIDDEN ** 0.5)   # PyTorch nn.RNN / nn.Linear init range
    params = {
        "w_ih": jax.random.uniform(ks[0], (HIDDEN, IN_DIM), jnp.float32, -bound, bound),
        "w_hh": jax.random.uniform(ks[1], (HIDDEN, HIDDEN), jnp.float32, -bound, bound),
        "b_ih": jax.random.uniform(ks[2], (HIDDEN,), jnp.float32, -bound, bound),
        "b_hh": jax.random.uniform(ks[3], (HIDDEN,), jnp.float32, -bound, bound),
        "fc_w": jax.random.uniform(ks[4], (num_classes, HIDDEN), jnp.float32, -bound, bound),
        "fc_b": jax.random.uniform(ks[5], (num_classes,), jnp.float32, -bound, bound),
    }

    # Widar BVP-style input: (B, 22, 20, 20); forward views it as (B, 22, 400).
    x = jax.random.normal(ks[6], (B, T_STEPS, 20, 20), jnp.float32)

    out = jax.jit(widar_rnn_forward)(x, params)
    out = jax.block_until_ready(out)

    ref = ref_forward(x, params)
    assert out.shape == ref.shape == (B, num_classes)
    max_err = float(jnp.max(jnp.abs(out - ref)))
    assert max_err < 2e-2, f"max abs err too large: {max_err}"

    print("KERNEL_OK")
</pallas_src>

<mosaic_0001>
module attributes {stable_mosaic.version = 11 : i64} {
  func.func @_widar_rnn_kernel(%arg0: i32, %arg1: memref<22x2x400xf32, #tpu.memory_space<vmem>>, %arg2: memref<400x64xf32, #tpu.memory_space<vmem>>, %arg3: memref<64x64xf32, #tpu.memory_space<vmem>>, %arg4: memref<1x64xf32, #tpu.memory_space<vmem>>, %arg5: memref<64x6xf32, #tpu.memory_space<vmem>>, %arg6: memref<1x6xf32, #tpu.memory_space<vmem>>, %arg7: memref<2x6xf32, #tpu.memory_space<vmem>>) attributes {dimension_semantics = [#tpu.dimension_semantics<arbitrary>], iteration_bounds = array<i64: 1>, scalar_prefetch = 0 : i64, scratch_operands = 0 : i64, tpu.core_type = #tpu.core_type<tc>, window_params = [{pipeline_mode = #tpu.pipeline_mode<synchronous>, transform_indices = @transform_0, window_bounds = array<i64: 22, 2, 400>}, {pipeline_mode = #tpu.pipeline_mode<synchronous>, transform_indices = @transform_1, window_bounds = array<i64: 400, 64>}, {pipeline_mode = #tpu.pipeline_mode<synchronous>, transform_indices = @transform_2, window_bounds = array<i64: 64, 64>}, {pipeline_mode = #tpu.pipeline_mode<synchronous>, transform_indices = @transform_3, window_bounds = array<i64: 1, 64>}, {pipeline_mode = #tpu.pipeline_mode<synchronous>, transform_indices = @transform_4, window_bounds = array<i64: 64, 6>}, {pipeline_mode = #tpu.pipeline_mode<synchronous>, transform_indices = @transform_5, window_bounds = array<i64: 1, 6>}, {pipeline_mode = #tpu.pipeline_mode<synchronous>, transform_indices = @transform_6, window_bounds = array<i64: 2, 6>}]} {
    %c0 = arith.constant 0 : index
    %c0_0 = arith.constant 0 : index
    %0 = vector.load %arg4[%c0, %c0_0] : memref<1x64xf32, #tpu.memory_space<vmem>>, vector<1x64xf32>
    %cst = arith.constant 0.000000e+00 : f32
    %1 = vector.broadcast %cst : f32 to vector<2x64xf32>
    %c0_i32 = arith.constant 0 : i32
    %c22_i32 = arith.constant 22 : i32
    %2 = arith.addi %c0_i32, %c22_i32 : i32
    %c1_i32 = arith.constant 1 : i32
    %3 = scf.for %arg8 = %c0_i32 to %2 step %c1_i32 iter_args(%arg9 = %1) -> (vector<2x64xf32>)  : i32 {
      %10 = arith.index_cast %arg8 : i32 to index
      %c0_9 = arith.constant 0 : index
      %c0_10 = arith.constant 0 : index
      %11 = vector.load %arg1[%10, %c0_9, %c0_10] : memref<22x2x400xf32, #tpu.memory_space<vmem>>, vector<1x2x400xf32>
      %12 = vector.shape_cast %11 : vector<1x2x400xf32> to vector<2x400xf32>
      %c0_11 = arith.constant 0 : index
      %c0_12 = arith.constant 0 : index
      %13 = vector.load %arg2[%c0_11, %c0_12] : memref<400x64xf32, #tpu.memory_space<vmem>>, vector<400x64xf32>
      %cst_13 = arith.constant dense<0.000000e+00> : vector<2x64xf32>
      %14 = tpu.matmul %12, %13, %cst_13 {dimension_numbers = #tpu.dot_dimension_numbers<[1], [0], [0], [1], [0, 0, 1, 1], [], []>} : vector<2x400xf32>, vector<400x64xf32>, vector<2x64xf32> -> vector<2x64xf32>
      %c0_14 = arith.constant 0 : index
      %c0_15 = arith.constant 0 : index
      %15 = vector.load %arg3[%c0_14, %c0_15] : memref<64x64xf32, #tpu.memory_space<vmem>>, vector<64x64xf32>
      %cst_16 = arith.constant dense<0.000000e+00> : vector<2x64xf32>
      %16 = tpu.matmul %arg9, %15, %cst_16 {dimension_numbers = #tpu.dot_dimension_numbers<[1], [0], [0], [1], [0, 0, 1, 1], [], []>} : vector<2x64xf32>, vector<64x64xf32>, vector<2x64xf32> -> vector<2x64xf32>
      %17 = arith.addf %14, %16 : vector<2x64xf32>
      %18 = vector.broadcast %0 : vector<1x64xf32> to vector<2x64xf32>
      %19 = arith.addf %17, %18 : vector<2x64xf32>
      %20 = math.tanh %19 : vector<2x64xf32>
      scf.yield %20 : vector<2x64xf32>
    }
    %c22_i32_1 = arith.constant 22 : i32
    %c0_2 = arith.constant 0 : index
    %c0_3 = arith.constant 0 : index
    %4 = vector.load %arg5[%c0_2, %c0_3] : memref<64x6xf32, #tpu.memory_space<vmem>>, vector<64x6xf32>
    %cst_4 = arith.constant dense<0.000000e+00> : vector<2x6xf32>
    %5 = tpu.matmul %3, %4, %cst_4 {dimension_numbers = #tpu.dot_dimension_numbers<[1], [0], [0], [1], [0, 0, 1, 1], [], []>} : vector<2x64xf32>, vector<64x6xf32>, vector<2x6xf32> -> vector<2x6xf32>
    %c0_5 = arith.constant 0 : index
    %c0_6 = arith.constant 0 : index
    %6 = vector.load %arg6[%c0_5, %c0_6] : memref<1x6xf32, #tpu.memory_space<vmem>>, vector<1x6xf32>
    %7 = vector.broadcast %6 : vector<1x6xf32> to vector<2x6xf32>
    %8 = arith.addf %5, %7 : vector<2x6xf32>
    %c0_7 = arith.constant 0 : index
    %c0_8 = arith.constant 0 : index
    %9 = vector.load %arg7[%c0_7, %c0_8] : memref<2x6xf32, #tpu.memory_space<vmem>>, vector<2x6xf32>
    tpu.vector_store %arg7[%c0_7, %c0_8], %8 {strides = array<i32>} : memref<2x6xf32, #tpu.memory_space<vmem>>, vector<2x6xf32>,
    return
  }
  func.func @transform_0(%arg0: i32) -> (i32, i32, i32) {
    %c0_i32 = arith.constant 0 : i32
    %c0_i32_0 = arith.constant 0 : i32
    %c0_i32_1 = arith.constant 0 : i32
    %c0_i32_2 = arith.constant 0 : i32
    return %c0_i32, %c0_i32_0, %c0_i32_1 : i32, i32, i32
  }
  func.func @transform_1(%arg0: i32) -> (i32, i32) {
    %c0_i32 = arith.constant 0 : i32
    %c0_i32_0 = arith.constant 0 : i32
    %c0_i32_1 = arith.constant 0 : i32
    return %c0_i32, %c0_i32_0 : i32, i32
  }
  func.func @transform_2(%arg0: i32) -> (i32, i32) {
    %c0_i32 = arith.constant 0 : i32
    %c0_i32_0 = arith.constant 0 : i32
    %c0_i32_1 = arith.constant 0 : i32
    return %c0_i32, %c0_i32_0 : i32, i32
  }
  func.func @transform_3(%arg0: i32) -> (i32, i32) {
    %c0_i32 = arith.constant 0 : i32
    %c0_i32_0 = arith.constant 0 : i32
    %c0_i32_1 = arith.constant 0 : i32
    return %c0_i32, %c0_i32_0 : i32, i32
  }
  func.func @transform_4(%arg0: i32) -> (i32, i32) {
    %c0_i32 = arith.constant 0 : i32
    %c0_i32_0 = arith.constant 0 : i32
    %c0_i32_1 = arith.constant 0 : i32
    return %c0_i32, %c0_i32_0 : i32, i32
  }
  func.func @transform_5(%arg0: i32) -> (i32, i32) {
    %c0_i32 = arith.constant 0 : i32
    %c0_i32_0 = arith.constant 0 : i32
    %c0_i32_1 = arith.constant 0 : i32
    return %c0_i32, %c0_i32_0 : i32, i32
  }
  func.func @transform_6(%arg0: i32) -> (i32, i32) {
    %c0_i32 = arith.constant 0 : i32
    %c0_i32_0 = arith.constant 0 : i32
    %c0_i32_1 = arith.constant 0 : i32
    return %c0_i32, %c0_i32_0 : i32, i32
  }
}

</mosaic_0001>

<llo_original>
// kernel: widar_rnn_forward.1
$region0: #{widar_rnn_forward.1}
  #allocation0 [shape = 'u32[]', space=smem, size = 0x4, offset = 0x4, fixed_abs, tag = 'smem constant byte address 0x4 - core index']
  #allocation1 [shape = 'u32[72,128]{1,0:T(1,128)}', space=vmem, size = 0x9000, scoped, tag = 'internal scratch']
  %s0 = inlined_call_operand.vmem [shape: f32[22,2,400], index: 0, kind: input, shape index: {}]
  %s1 = inlined_call_operand.vmem [shape: f32[400,64], index: 1, kind: input, shape index: {}]
  %s2 = inlined_call_operand.vmem [shape: f32[64,64], index: 2, kind: input, shape index: {}]
  %s3 = inlined_call_operand.vmem [shape: f32[1,64], index: 3, kind: input, shape index: {}]
  %s4 = inlined_call_operand.vmem [shape: f32[64,6], index: 4, kind: input, shape index: {}]
  %s5 = inlined_call_operand.vmem [shape: f32[1,6], index: 5, kind: input, shape index: {}]
  %s6 = inlined_call_operand.hbm [shape: f32[2,6], index: 6, kind: output, shape index: {}]
  %s7 = sld [smem:[#allocation0]]
  $region41: #{widar_rnn_forward.1} parent=0
    _
  %s9 = ssub.s32 1, %s7
  %s10 = scalar_select 0, %s9, %s7
  $region1: #{widar_rnn_forward.1} parent=0
    #allocation2 [shape = 'u8[1024]{0}', space=vmem, size = 0x400, scoped, tag = 'output window, operand 0, single buffered']
    #allocation3 [shape = 's32[1]{0}', space=sflag, size = 0x4, scoped, tag = 'scoped memory for widar_rnn_forward.1']
    %11 = vsyncpa [#allocation3], 0
    // Predicated region
    $region2: #{widar_rnn_forward.1} parent=1 // pred_check
      _
    $region3: #{widar_rnn_forward.1} parent=1 // pred_check_branch
      %13 = sbr.rel (0) target = $region5
    $region4: #{widar_rnn_forward.1} parent=1 // pred_region
      _
    $region5: #{widar_rnn_forward.1} parent=1 // pred_fallthru
      _
    // Predicated region
    $region6: #{widar_rnn_forward.1} parent=1 // pred_check
      _
    $region7: #{widar_rnn_forward.1} parent=1 // pred_check_branch
      %15 = sbr.rel (0) target = $region9
    $region8: #{widar_rnn_forward.1} parent=1 // pred_region
      _
    $region9: #{widar_rnn_forward.1} parent=1 // pred_fallthru
      _
    // Predicated region
    $region10: #{widar_rnn_forward.1} parent=1 // pred_check
      _
    $region11: #{widar_rnn_forward.1} parent=1 // pred_check_branch
      %17 = sbr.rel (0) target = $region13
    $region12: #{widar_rnn_forward.1} parent=1 // pred_region
      _
    $region13: #{widar_rnn_forward.1} parent=1 // pred_fallthru
      _
    // Predicated region
    $region14: #{widar_rnn_forward.1} parent=1 // pred_check
      _
    $region15: #{widar_rnn_forward.1} parent=1 // pred_check_branch
      %19 = sbr.rel (0) target = $region17
    $region16: #{widar_rnn_forward.1} parent=1 // pred_region
      _
    $region17: #{widar_rnn_forward.1} parent=1 // pred_fallthru
      _
    // Predicated region
    $region18: #{widar_rnn_forward.1} parent=1 // pred_check
      _
    $region19: #{widar_rnn_forward.1} parent=1 // pred_check_branch
      %21 = sbr.rel (0) target = $region21
    $region20: #{widar_rnn_forward.1} parent=1 // pred_region
      _
    $region21: #{widar_rnn_forward.1} parent=1 // pred_fallthru
      _
    // Predicated region
    $region22: #{widar_rnn_forward.1} parent=1 // pred_check
      _
    $region23: #{widar_rnn_forward.1} parent=1 // pred_check_branch
      %23 = sbr.rel (0) target = $region25
    $region24: #{widar_rnn_forward.1} parent=1 // pred_region
      _
    $region25: #{widar_rnn_forward.1} parent=1 // pred_fallthru
      _
    %v24 = vld [vmem:[%s3] sm:$0x1]
    loop: start=0, step=1, limit=22
    $region26: #{widar_rnn_forward.1} parent=1 // loop_pre_header
      _
    $region27: #{widar_rnn_forward.1} parent=1 // loop_header
      %s26 = sphi 0, %s30
      %p27 = scmp.ge.s32.totalorder %s26, 22
      %v31 = vphi 0.0, %v214
    $region28: #{widar_rnn_forward.1} parent=1 // loop_header_branch
      %29 = sbr.rel (%p27) target = $region32
    $region29: #{widar_rnn_forward.1} parent=1 // loop_body
      %s32 = smul.u32 %s26, 4
      %s33 = smul.addr %s32, 2
      %s34 = scalar_lea.vmem %s0, %s33
      %v35 = vld [vmem:[%s34] sm:$0xff]
      %v36 = vld [vmem:[%s1] sm:$0xff]
      %v37 = vld [vmem:[%s1 + $0x8] sm:$0xff]
      %v38 = vld [vmem:[%s1 + $0x10] sm:$0xff]
      %v39 = vld [vmem:[%s1 + $0x18] sm:$0xff]
      %v40 = vld [vmem:[%s1 + $0x20] sm:$0xff]
      %v41 = vld [vmem:[%s1 + $0x28] sm:$0xff]
      %v42 = vld [vmem:[%s1 + $0x30] sm:$0xff]
      %v43 = vld [vmem:[%s1 + $0x38] sm:$0xff]
      %v44 = vld [vmem:[%s1 + $0x40] sm:$0xff]
      %v45 = vld [vmem:[%s1 + $0x48] sm:$0xff]
      %v46 = vld [vmem:[%s1 + $0x50] sm:$0xff]
      %v47 = vld [vmem:[%s1 + $0x58] sm:$0xff]
      %v48 = vld [vmem:[%s1 + $0x60] sm:$0xff]
      %v49 = vld [vmem:[%s1 + $0x68] sm:$0xff]
      %v50 = vld [vmem:[%s1 + $0x70] sm:$0xff]
      %v51 = vld [vmem:[%s1 + $0x78] sm:$0xff]
      %v52 = vld [vmem:[%s1 + $0x80] sm:$0xff]
      %v53 = vld [vmem:[%s1 + $0x88] sm:$0xff]
      %v54 = vld [vmem:[%s1 + $0x90] sm:$0xff]
      %v55 = vld [vmem:[%s1 + $0x98] sm:$0xff]
      %v56 = vld [vmem:[%s1 + $0xa0] sm:$0xff]
      %v57 = vld [vmem:[%s1 + $0xa8] sm:$0xff]
      %v58 = vld [vmem:[%s1 + $0xb0] sm:$0xff]
      %v59 = vld [vmem:[%s1 + $0xb8] sm:$0xff]
      %v60 = vld [vmem:[%s1 + $0xc0] sm:$0xff]
      %v61 = vld [vmem:[%s1 + $0xc8] sm:$0xff]
      %v62 = vld [vmem:[%s1 + $0xd0] sm:$0xff]
      %v63 = vld [vmem:[%s1 + $0xd8] sm:$0xff]
      %v64 = vld [vmem:[%s1 + $0xe0] sm:$0xff]
      %v65 = vld [vmem:[%s1 + $0xe8] sm:$0xff]
      %v66 = vld [vmem:[%s1 + $0xf0] sm:$0xff]
      %v67 = vld [vmem:[%s1 + $0xf8] sm:$0xff]
      %v68 = vld [vmem:[%s1 + $0x100] sm:$0xff]
      %v69 = vld [vmem:[%s1 + $0x108] sm:$0xff]
      %v70 = vld [vmem:[%s1 + $0x110] sm:$0xff]
      %v71 = vld [vmem:[%s1 + $0x118] sm:$0xff]
      %v72 = vld [vmem:[%s1 + $0x120] sm:$0xff]
      %v73 = vld [vmem:[%s1 + $0x128] sm:$0xff]
      %v74 = vld [vmem:[%s1 + $0x130] sm:$0xff]
      %v75 = vld [vmem:[%s1 + $0x138] sm:$0xff]
      %v76 = vld [vmem:[%s1 + $0x140] sm:$0xff]
      %v77 = vld [vmem:[%s1 + $0x148] sm:$0xff]
      %v78 = vld [vmem:[%s1 + $0x150] sm:$0xff]
      %v79 = vld [vmem:[%s1 + $0x158] sm:$0xff]
      %v80 = vld [vmem:[%s1 + $0x160] sm:$0xff]
      %v81 = vld [vmem:[%s1 + $0x168] sm:$0xff]
      %v82 = vld [vmem:[%s1 + $0x170] sm:$0xff]
      %v83 = vld [vmem:[%s1 + $0x178] sm:$0xff]
      %v84 = vld [vmem:[%s1 + $0x180] sm:$0xff]
      %v85 = vld [vmem:[%s1 + $0x188] sm:$0xff]
      %v86 = vld [vmem:[%s2] sm:$0xff]
      %v87 = vld [vmem:[%s2 + $0x8] sm:$0xff]
      %v88 = vld [vmem:[%s2 + $0x10] sm:$0xff]
      %v89 = vld [vmem:[%s2 + $0x18] sm:$0xff]
      %v90 = vld [vmem:[%s2 + $0x20] sm:$0xff]
      %v91 = vld [vmem:[%s2 + $0x28] sm:$0xff]
      %v92 = vld [vmem:[%s2 + $0x30] sm:$0xff]
      %v93 = vld [vmem:[%s2 + $0x38] sm:$0xff]
      %vm94 = vcmask 523264
      %v96 = vsel %vm94, %v31, 0
      %98 = vmatpush.msra.mxu0 0.0
      %99 = vmatpush.msra.mxu0 0.0
      %100 = vmatpush.msra.mxu0 0.0
      %101 = vmatpush.msra.mxu0 0.0
      %102 = vmatpush.msra.mxu0 0.0
      %103 = vmatpush.msra.mxu0 0.0
      %104 = vmatpush.msra.mxu0 0.0
      %105 = vmatpush.msra.mxu0 0.0
      %106 = vmatpush.msra.mxu0 %v93
      %107 = vmatpush.msra.mxu0 %v92
      %108 = vmatpush.msra.mxu0 %v91
      %109 = vmatpush.msra.mxu0 %v90
      %110 = vmatpush.msra.mxu0 %v89
      %111 = vmatpush.msra.mxu0 %v88
      %112 = vmatpush.msra.mxu0 %v87
      %113 = vmatpush.msra.mxu0 %v86
      %114 = vmatmul.f32.gmra.mxu0 %v96
      %v115 = vpop.f32.mrf.mxu0
      %v116 = vadd.f32 0.0, %v115
      %117 = vdwg.mxu0
      %119 = vst [vmem:[#allocation1] ss:$4 sm:$0xff] %v35
      %v120 = vld.sshfl [vmem:[#allocation1] sm:$0xff pattern:$0x73625140]
      %v121 = vld.sshfl [vmem:[#allocation1 + $0x8] sm:$0xff pattern:$0x73625140]
      %v122 = vld.sshfl [vmem:[#allocation1 + $0x10] sm:$0xff pattern:$0x73625140]
      %v123 = vld.sshfl [vmem:[#allocation1 + $0x18] sm:$0xff pattern:$0x73625140]
      %vm127 = vcmask 130048
      %v128 = vsel %vm127, %v123, 0
      %130 = vmatpush.msra.mxu0 %v51
      %131 = vmatpush.msra.mxu0 %v50
      %132 = vmatpush.msra.mxu0 %v49
      %133 = vmatpush.msra.mxu0 %v48
      %134 = vmatpush.msra.mxu0 %v47
      %135 = vmatpush.msra.mxu0 %v46
      %136 = vmatpush.msra.mxu0 %v45
      %137 = vmatpush.msra.mxu0 %v44
      %138 = vmatpush.msra.mxu0 %v43
      %139 = vmatpush.msra.mxu0 %v42
      %140 = vmatpush.msra.mxu0 %v41
      %141 = vmatpush.msra.mxu0 %v40
      %142 = vmatpush.msra.mxu0 %v39
      %143 = vmatpush.msra.mxu0 %v38
      %144 = vmatpush.msra.mxu0 %v37
      %145 = vmatpush.msra.mxu0 %v36
      %146 = vmatmul.f32.gmra.mxu0 %v120
      %v147 = vpop.f32.mrf.mxu0
      %v148 = vadd.f32 %v116, %v147
      %149 = vdwg.mxu0
      %150 = vmatpush.msra.mxu0 %v67
      %151 = vmatpush.msra.mxu0 %v66
      %152 = vmatpush.msra.mxu0 %v65
      %153 = vmatpush.msra.mxu0 %v64
      %154 = vmatpush.msra.mxu0 %v63
      %155 = vmatpush.msra.mxu0 %v62
      %156 = vmatpush.msra.mxu0 %v61
      %157 = vmatpush.msra.mxu0 %v60
      %158 = vmatpush.msra.mxu0 %v59
      %159 = vmatpush.msra.mxu0 %v58
      %160 = vmatpush.msra.mxu0 %v57
      %161 = vmatpush.msra.mxu0 %v56
      %162 = vmatpush.msra.mxu0 %v55
      %163 = vmatpush.msra.mxu0 %v54
      %164 = vmatpush.msra.mxu0 %v53
      %165 = vmatpush.msra.mxu0 %v52
      %166 = vmatmul.f32.gmra.mxu0 %v121
      %v167 = vpop.f32.mrf.mxu0
      %v168 = vadd.f32 %v148, %v167
      %169 = vdwg.mxu0
      %170 = vmatpush.msra.mxu0 %v83
      %171 = vmatpush.msra.mxu0 %v82
      %172 = vmatpush.msra.mxu0 %v81
      %173 = vmatpush.msra.mxu0 %v80
      %174 = vmatpush.msra.mxu0 %v79
      %175 = vmatpush.msra.mxu0 %v78
      %176 = vmatpush.msra.mxu0 %v77
      %177 = vmatpush.msra.mxu0 %v76
      %178 = vmatpush.msra.mxu0 %v75
      %179 = vmatpush.msra.mxu0 %v74
      %180 = vmatpush.msra.mxu0 %v73
      %181 = vmatpush.msra.mxu0 %v72
      %182 = vmatpush.msra.mxu0 %v71
      %183 = vmatpush.msra.mxu0 %v70
      %184 = vmatpush.msra.mxu0 %v69
      %185 = vmatpush.msra.mxu0 %v68
      %186 = vmatmul.f32.gmra.mxu0 %v122
      %v187 = vpop.f32.mrf.mxu0
      %v188 = vadd.f32 %v168, %v187
      %189 = vdwg.mxu0
      %190 = vmatpush.msra.mxu0 0.0
      %191 = vmatpush.msra.mxu0 0.0
      %192 = vmatpush.msra.mxu0 0.0
      %193 = vmatpush.msra.mxu0 0.0
      %194 = vmatpush.msra.mxu0 0.0
      %195 = vmatpush.msra.mxu0 0.0
      %196 = vmatpush.msra.mxu0 0.0
      %197 = vmatpush.msra.mxu0 0.0
      %198 = vmatpush.msra.mxu0 0.0
      %199 = vmatpush.msra.mxu0 0.0
      %200 = vmatpush.msra.mxu0 0.0
      %201 = vmatpush.msra.mxu0 0.0
      %202 = vmatpush.msra.mxu0 0.0
      %203 = vmatpush.msra.mxu0 0.0
      %204 = vmatpush.msra.mxu0 %v85
      %205 = vmatpush.msra.mxu0 %v84
      %206 = vmatmul.f32.gmra.mxu0 %v128
      %v207 = vpop.f32.mrf.mxu0
      %v208 = vadd.f32 %v188, %v207
      %209 = vdwg.mxu0
      %v211 = vperm.slane %v24, 0
      %v213 = vadd.f32 %v208, %v211
      %v214 = vtanh.pop %v213
    $region30: #{widar_rnn_forward.1} parent=1 // loop_footer
      %s30 = sadd.s32 1, %s26
    $region31: #{widar_rnn_forward.1} parent=1 // loop_footer_branch
      %25 = sbr.rel target = $region27
    $region32: #{widar_rnn_forward.1} parent=1 // loop_exit
      _
    %v215 = vld [vmem:[%s4] sm:$0xff]
    %v216 = vld [vmem:[%s4 + $0x8] sm:$0xff]
    %v217 = vld [vmem:[%s4 + $0x10] sm:$0xff]
    %v218 = vld [vmem:[%s4 + $0x18] sm:$0xff]
    %v219 = vld [vmem:[%s4 + $0x20] sm:$0xff]
    %v220 = vld [vmem:[%s4 + $0x28] sm:$0xff]
    %v221 = vld [vmem:[%s4 + $0x30] sm:$0xff]
    %v222 = vld [vmem:[%s4 + $0x38] sm:$0xff]
    %v223 = vld [vmem:[%s5] sm:$0x1]
    %v225 = vperm.slane %v223, 0
    %vm227 = vcmask 523264
    %v229 = vsel %vm227, %v31, 0
    %231 = vmatpush.msra.mxu0 0.0
    %232 = vmatpush.msra.mxu0 0.0
    %233 = vmatpush.msra.mxu0 0.0
    %234 = vmatpush.msra.mxu0 0.0
    %235 = vmatpush.msra.mxu0 0.0
    %236 = vmatpush.msra.mxu0 0.0
    %237 = vmatpush.msra.mxu0 0.0
    %238 = vmatpush.msra.mxu0 0.0
    %239 = vmatpush.msra.mxu0 %v222
    %240 = vmatpush.msra.mxu0 %v221
    %241 = vmatpush.msra.mxu0 %v220
    %242 = vmatpush.msra.mxu0 %v219
    %243 = vmatpush.msra.mxu0 %v218
    %244 = vmatpush.msra.mxu0 %v217
    %245 = vmatpush.msra.mxu0 %v216
    %246 = vmatpush.msra.mxu0 %v215
    %247 = vmatmul.f32.gmra.mxu0 %v229
    %v248 = vpop.f32.mrf.mxu0
    %v249 = vadd.f32 %v225, %v248
    %250 = vdwg.mxu0
    %vm251 = vcmask 41984
    %252 = vst.msk [vmem:[#allocation2] sm:$0x3] %vm251, %v249
    // Predicated region
    $region33: #{widar_rnn_forward.1} parent=1 // pred_check
      _
    $region34: #{widar_rnn_forward.1} parent=1 // pred_check_branch
      %254 = sbr.rel (0) target = $region36
    $region35: #{widar_rnn_forward.1} parent=1 // pred_region
      %256 = vsyncadd [#allocation3], 0
      %s258 = sshll.u32 [#allocation2], 4
      %s259 = int_to_ptr.vmem [resolvable:$true] %s258
      %s260 = sshll.u32 %s6, 4
      %s261 = int_to_ptr.hbm [resolvable:$true] %s260
      %263 = dma.vmem_to_hbm [thread:$0]  %s259, 32, %s261, [#allocation3]
    $region36: #{widar_rnn_forward.1} parent=1 // pred_fallthru
      _
    // Predicated region
    $region37: #{widar_rnn_forward.1} parent=1 // pred_check
      _
    $region38: #{widar_rnn_forward.1} parent=1 // pred_check_branch
      %265 = sbr.rel (0) target = $region40
    $region39: #{widar_rnn_forward.1} parent=1 // pred_region
      %267 = dma.done [#allocation3], 32
    $region40: #{widar_rnn_forward.1} parent=1 // pred_fallthru
      _
    %268 = vsyncpa [#allocation3], 1

</llo_original>
